<compile_context>
chip_gen: v6e
topology: v6e:2x2x1
jax: 0.10.0
libtpu: 0.0.40
codegen_flags: <defaults>
</compile_context>

<pallas_src>
import functools

import jax
import jax.numpy as jnp
import numpy as np
from jax import lax
from jax.experimental import pallas as pl
from jax.experimental.pallas import tpu as pltpu

MIN_NORM = 1e-15
MIN_NORM_SQ = MIN_NORM * MIN_NORM
ATANH_EPS = 1e-7  # f32-safe clamp for the artanh argument


def _artanh(x):
    # two EUP logs instead of an exact VALU divide (EUP has slack).
    x = jnp.clip(x, -1.0 + ATANH_EPS, 1.0 - ATANH_EPS)
    return 0.5 * (jnp.log(1.0 + x) - jnp.log(1.0 - x))


# ----------------------------- in-kernel helpers -----------------------------
def _row_sq_norm(x):
    """Per-row ||x||^2 via the MXU ((n,D) x (D,1) against a ones column)."""
    d = x.shape[-1]
    ones_col = jnp.ones((d, 1), jnp.float32)
    return lax.dot_general(x * x, ones_col, (((1,), (0,)), ((), ())),
                           preferred_element_type=jnp.float32)


def _row_dots(x, rows):
    """(n, D) . (k, D)^T -> (n, k): batched per-row dots in one MXU push."""
    return lax.dot_general(x, rows, (((1,), (1,)), ((), ())),
                           preferred_element_type=jnp.float32)


# --------------------- pass 1: gyro-midpoint partial sums ---------------------
def _midpoint_sums_kernel(x_ref, num_ref, den_ref, *, c, n_valid, tile_n,
                          needs_mask):
    t = pl.program_id(0)
    x = x_ref[...].astype(jnp.float32)                        # (tile_n, D)
    x2 = _row_sq_norm(x)                                      # (tile_n, 1)
    # exact reciprocal: 1 - c*||x||^2 can approach 0 near the ball boundary.
    lam = 2.0 / jnp.maximum(1.0 - c * x2, MIN_NORM)
    lam_x = lam * x
    lam_m1 = lam - 1.0
    if needs_mask:
        gid = t * tile_n + lax.broadcasted_iota(jnp.int32, (tile_n, 1), 0)
        valid = gid < n_valid
        lam_x = jnp.where(valid, lam_x, 0.0)                  # NaN-safe masking
        lam_m1 = jnp.where(valid, lam_m1, 0.0)
    num_ref[...] = jnp.sum(lam_x, axis=0, keepdims=True).reshape(num_ref.shape)
    den_ref[...] = jnp.sum(lam_m1, axis=0, keepdims=True).reshape(den_ref.shape)


# -------------------- pass 2: Frechet-variance partial sums -------------------
def _variance_sums_kernel(x_ref, m_ref, vs_ref, *, c, n_valid, tile_n,
                          needs_mask):
    sqrt_c = c ** 0.5
    t = pl.program_id(0)
    x = x_ref[...].astype(jnp.float32)                        # (tile_n, D)
    m = m_ref[...]                                            # (1, D)
    m2 = jnp.sum(m * m, axis=-1, keepdims=True)               # (1, 1)

    x2 = _row_sq_norm(x)                                      # (tile_n, 1)
    xm = _row_dots(x, m)                                      # (tile_n, 1) <x,m>

    # sub = (-m) (+)_c x ; only ||sub||^2 is needed -> per-row scalar algebra.
    a = 1.0 + c * (x2 - 2.0 * xm)                             # 1 + 2c<x,-m> + c|x|^2
    b = 1.0 - c * m2
    inv_den = 1.0 / jnp.maximum(1.0 + c * (c * m2 * x2 - 2.0 * xm), MIN_NORM)
    sub2 = (a * a * m2 - 2.0 * a * b * xm + b * b * x2) * (inv_den * inv_den)
    sn = jnp.sqrt(jnp.maximum(sub2, MIN_NORM_SQ))
    at = _artanh(sqrt_c * sn)
    dist_sq = (4.0 / c) * at * at                             # ((2/sqrt_c)*at)^2
    if needs_mask:
        gid = t * tile_n + lax.broadcasted_iota(jnp.int32, (tile_n, 1), 0)
        dist_sq = jnp.where(gid < n_valid, dist_sq, 0.0)
    vs_ref[...] = jnp.sum(dist_sq, axis=0, keepdims=True).reshape(vs_ref.shape)


# ------------------ pass 3: per-row transport / rescale / expmap --------------
def _apply_kernel(consts_ref, x_ref, vecs_ref, o_ref, *, c):
    """consts (SMEM f32[8]): [m2, u2, uv, 1-c*m2, 1-c*u2, 2/d_, wK, tanh_k]
    vecs   (VMEM (2,D))  : row 0 = gyro-midpoint m, row 1 = y = expmap0(mean)
    """
    sqrt_c = c ** 0.5
    inv_sqrt_c = 1.0 / sqrt_c
    c2 = c * c

    m2 = consts_ref[0]
    u2 = consts_ref[1]
    uv = consts_ref[2]            # <y, -m>
    b = consts_ref[3]             # 1 - c*||m||^2
    cu2 = consts_ref[4]           # 1 - c*||y||^2
    two_inv_d = consts_ref[5]     # 2 / gyration denominator (exact)
    wk = consts_ref[6]            # (1 - c*||m||^2)/sqrt_c  (= 2/(sqrt_c*lam_m))
    tanh_k = consts_ref[7]        # 0.5*sqrt_c*lam_y*sqrt(var/(in_var+eps))*lam_m/lam_y

    x = x_ref[...].astype(jnp.float32)                        # (tile_n, D)
    vecs = vecs_ref[...]                                      # (2, D)
    m_row = vecs[0:1, :]
    y_row = vecs[1:2, :]

    x2 = _row_sq_norm(x)                                      # (tile_n, 1)
    dots = _row_dots(x, vecs)                                 # (tile_n, 2)
    xm = dots[:, 0:1]                                         # <x, m>
    xy = dots[:, 1:2]                                         # <x, y>

    # ---- logmap(input_mean, x): sub = (-m) (+)_c x, scalars only ----
    a = 1.0 + c * (x2 - 2.0 * xm)
    inv_den = 1.0 / jnp.maximum(1.0 + c * (c * m2 * x2 - 2.0 * xm), MIN_NORM)
    sub2 = (a * a * m2 - 2.0 * a * b * xm + b * b * x2) * (inv_den * inv_den)
    sub2c = jnp.maximum(sub2, MIN_NORM_SQ)
    inv_sn = lax.rsqrt(sub2c)
    at = _artanh(sqrt_c * (sub2c * inv_sn))
    wcoef = wk * at * inv_sn                                  # w = wcoef * sub

    # ---- gyration gyr[y, -m] w, expressed in the {x, y, -m} basis ----
    sub_y = (a * uv + b * xy) * inv_den                       # <sub, y>
    sub_v = (a * m2 - b * xm) * inv_den                       # <sub, -m>
    uw = wcoef * sub_y
    vw = wcoef * sub_v
    alpha = two_inv_d * (c * vw + c2 * (2.0 * uv * vw - uw * m2))
    beta = two_inv_d * (-(c2 * vw * u2 + c * uw))
    wcid = wcoef * inv_den
    g_x = wcid * b                                            # gyr = g_x*x
    g_v = wcid * a + beta                                     #   + alpha*y + g_v*(-m)

    g2 = (wcoef * wcoef * sub2 + alpha * alpha * u2 + beta * beta * m2
          + 2.0 * (alpha * uw + beta * vw + alpha * beta * uv))
    gy = uw + alpha * u2 + beta * uv                          # <gyr, y>
    g2c = jnp.maximum(g2, MIN_NORM_SQ)
    inv_gn = lax.rsqrt(g2c)

    # ---- rescale + expmap(y, .): `second` = sec*gyr is never materialised ----
    sec = jnp.tanh(tanh_k * (g2c * inv_gn)) * (inv_sqrt_c * inv_gn)
    ys = sec * gy                                             # <y, second>
    s2 = sec * sec * g2                                       # ||second||^2
    inv_do = 1.0 / jnp.maximum(1.0 + 2.0 * c * ys + c2 * u2 * s2, MIN_NORM)
    coef_g = cu2 * sec * inv_do
    cx = coef_g * g_x
    cy = (1.0 + c * (2.0 * ys + s2)) * inv_do + coef_g * alpha
    cm = -(coef_g * g_v)

    out = cx * x + cy * y_row + cm * m_row
    o_ref[...] = out.astype(o_ref.dtype)


# ------------------------------ python wrapper --------------------------------
def poincare_batch_norm(x, mean_param, var_param, c=1.0, *,
                        target_block_bytes=2 * 1024 * 1024):
    """x: (N, D) points on the Poincare ball; mean_param: (D,); var: scalar."""
    n, d = x.shape
    c = float(c)
    sqrt_c = c ** 0.5

    # Batch tiling: multiple of 8 sublanes, <= target_block_bytes of x per tile,
    # capped at 2048 rows so the lane-sparse (tile, 1) scalar chain of the apply
    # kernel stays well inside v7x's 64 MiB VMEM (re-sweep per generation).
    rows = max(8, min(2048, (target_block_bytes // max(d * 4, 1)) // 8 * 8))
    tile_n = min(rows, ((n + 7) // 8) * 8)
    num_tiles = pl.cdiv(n, tile_n)
    needs_mask = (n % tile_n) != 0

    cparams = pltpu.CompilerParams(
        dimension_semantics=("parallel",),
        vmem_limit_bytes=48 * 1024 * 1024)
    x_spec = pl.BlockSpec((tile_n, d), lambda t: (t, 0))

    # ---- pass 1: per-tile partial sums for the HNN++ gyro-midpoint ----
    p_num, p_den = pl.pallas_call(
        functools.partial(_midpoint_sums_kernel, c=c, n_valid=n,
                          tile_n=tile_n, needs_mask=needs_mask),
        grid=(num_tiles,),
        in_specs=[x_spec],
        out_specs=(pl.BlockSpec((1, 1, d), lambda t: (t, 0, 0)),
                   pl.BlockSpec((1, 1, 1), lambda t: (t, 0, 0))),
        out_shape=(jax.ShapeDtypeStruct((num_tiles, 1, d), jnp.float32),
                   jax.ShapeDtypeStruct((num_tiles, 1, 1), jnp.float32)),
        compiler_params=cparams,
    )(x)

    # ---- tiny (1, D) midpoint finalise in plain JAX (hoisted prologue) ----
    z_num = jnp.sum(p_num, axis=0)                               # (1, d)
    z_den = jnp.maximum(jnp.sum(p_den, axis=0), MIN_NORM)        # (1, 1)
    z = z_num / z_den
    zn = jnp.maximum(jnp.linalg.norm(z, axis=-1, keepdims=True), MIN_NORM)
    m = (jnp.tanh(0.5 * _artanh(sqrt_c * zn)) * z / (sqrt_c * zn)
         ).astype(jnp.float32)                                   # midpoint (1, d)

    # ---- pass 2: per-tile partial sums of the Frechet variance ----
    p_var = pl.pallas_call(
        functools.partial(_variance_sums_kernel, c=c, n_valid=n,
                          tile_n=tile_n, needs_mask=needs_mask),
        grid=(num_tiles,),
        in_specs=[x_spec, pl.BlockSpec((1, d), lambda t: (0, 0))],
        out_specs=pl.BlockSpec((1, 1, 1), lambda t: (t, 0, 0)),
        out_shape=jax.ShapeDtypeStruct((num_tiles, 1, 1), jnp.float32),
        compiler_params=cparams,
    )(x, m)
    input_var = jnp.sum(p_var, axis=0) / float(n)                # (1, 1)

    # ---- remaining (1, D)/(1, 1) apply prologue, in plain JAX ----
    mean_p = mean_param.reshape(1, d).astype(jnp.float32)
    mn = jnp.maximum(jnp.linalg.norm(mean_p, axis=-1, keepdims=True), MIN_NORM)
    y = jnp.tanh(sqrt_c * mn) * mean_p / (sqrt_c * mn)           # expmap0(mean)

    m2 = jnp.sum(m * m, axis=-1, keepdims=True)
    u2 = jnp.sum(y * y, axis=-1, keepdims=True)
    uv = -jnp.sum(y * m, axis=-1, keepdims=True)                 # <y, -m>
    one_m_cm2 = jnp.maximum(1.0 - c * m2, MIN_NORM)
    one_m_cu2 = jnp.maximum(1.0 - c * u2, MIN_NORM)
    lam_y = 2.0 / one_m_cu2
    two_inv_d = 2.0 / jnp.maximum(1.0 + 2.0 * c * uv + c * c * u2 * m2, MIN_NORM)
    var_p = jnp.asarray(var_param, jnp.float32).reshape(1, 1)
    scale = jnp.sqrt(var_p / (input_var + 1e-6))
    row_coef = scale * one_m_cu2 / one_m_cm2                     # scale*lam_m/lam_y
    consts = jnp.concatenate(
        [m2, u2, uv, 1.0 - c * m2, 1.0 - c * u2, two_inv_d,
         one_m_cm2 / sqrt_c, 0.5 * sqrt_c * lam_y * row_coef],
        axis=-1).reshape(-1).astype(jnp.float32)                 # (8,)
    vecs = jnp.concatenate([m, y], axis=0).astype(jnp.float32)   # (2, d)

    # ---- pass 3: per-row transport / rescale / expmap ----
    out = pl.pallas_call(
        functools.partial(_apply_kernel, c=c),
        grid=(num_tiles,),
        in_specs=[pl.BlockSpec(memory_space=pltpu.MemorySpace.SMEM),
                  x_spec,
                  pl.BlockSpec((2, d), lambda t: (0, 0))],
        out_specs=pl.BlockSpec((tile_n, d), lambda t: (t, 0)),
        out_shape=jax.ShapeDtypeStruct((n, d), x.dtype),
        compiler_params=cparams,
    )(consts, x, vecs)
    return out


# --------------------------- pure-JAX reference --------------------------------
def _mobius_add(a, b, c):
    a2 = jnp.sum(a * a, axis=-1, keepdims=True)
    b2 = jnp.sum(b * b, axis=-1, keepdims=True)
    ab = jnp.sum(a * b, axis=-1, keepdims=True)
    num = (1.0 + 2.0 * c * ab + c * b2) * a + (1.0 - c * a2) * b
    den = 1.0 + 2.0 * c * ab + (c * c) * a2 * b2
    return num / jnp.maximum(den, MIN_NORM)


def _reference(x, mean_param, var_param, c=1.0):
    sqrt_c = c ** 0.5
    mean_p = mean_param.reshape(1, -1)
    mn = jnp.maximum(jnp.linalg.norm(mean_p, axis=-1, keepdims=True), MIN_NORM)
    mob = jnp.tanh(sqrt_c * mn) * mean_p / (sqrt_c * mn)
    x2 = jnp.sum(x * x, -1, keepdims=True)
    lam = 2.0 / jnp.maximum(1.0 - c * x2, MIN_NORM)
    z = jnp.sum(lam * x, 0, keepdims=True) / jnp.maximum(
        jnp.sum(lam - 1.0, 0, keepdims=True), MIN_NORM)
    zn = jnp.maximum(jnp.linalg.norm(z, axis=-1, keepdims=True), MIN_NORM)
    m = jnp.tanh(0.5 * _artanh(sqrt_c * zn)) * z / (sqrt_c * zn)
    sub = _mobius_add(-m, x, c)
    sn = jnp.maximum(jnp.linalg.norm(sub, axis=-1, keepdims=True), MIN_NORM)
    at = _artanh(sqrt_c * sn)
    var_in = jnp.mean(((2.0 / sqrt_c) * at) ** 2)
    lam_m = 2.0 / jnp.maximum(1.0 - c * jnp.sum(m * m, -1, keepdims=True), MIN_NORM)
    logm = (2.0 / (sqrt_c * lam_m)) * at * sub / sn
    y, v, w = mob, -m, logm
    u2 = jnp.sum(y * y, -1, keepdims=True)
    v2 = jnp.sum(v * v, -1, keepdims=True)
    uv = jnp.sum(y * v, -1, keepdims=True)
    uw = jnp.sum(y * w, -1, keepdims=True)
    vw = jnp.sum(v * w, -1, keepdims=True)
    c2 = c * c
    gyr = w + 2.0 * ((-c2 * uw * v2 + c * vw + 2 * c2 * uv * vw) * y
                     + (-c2 * vw * u2 - c * uw) * v) / jnp.maximum(
        1.0 + 2 * c * uv + c2 * u2 * v2, MIN_NORM)
    lam_y = 2.0 / jnp.maximum(1.0 - c * u2, MIN_NORM)
    logm_t = jnp.sqrt(var_param / (var_in + 1e-6)) * gyr * (lam_m / lam_y)
    un = jnp.maximum(jnp.linalg.norm(logm_t, axis=-1, keepdims=True), MIN_NORM)
    second = jnp.tanh(0.5 * sqrt_c * lam_y * un) * logm_t / (sqrt_c * un)
    return _mobius_add(y, second, c)


if __name__ == "__main__":
    key = jax.random.PRNGKey(0)
    kx, km, kx2 = jax.random.split(key, 3)

    c = 1.0
    D = 32
    mean_param = 0.01 * jax.random.normal(km, (D,), dtype=jnp.float32)
    var_param = jnp.float32(1.0)

    # Tolerance: all boundary-sensitive reciprocals are now exact; the residual
    # margin only covers MXU f32 rounding / association-order differences.

    # -- case 1: single tile, no ragged tail (N multiple of 8) --
    N = 8
    x = 0.1 * jax.random.normal(kx, (N, D), dtype=jnp.float32)
    out = jax.block_until_ready(poincare_batch_norm(x, mean_param, var_param, c=c))
    ref = _reference(x, mean_param, var_param, c=c)
    assert out.shape == (N, D)
    assert bool(jnp.all(jnp.isfinite(out)))
    np.testing.assert_allclose(np.asarray(out), np.asarray(ref),
                               rtol=1e-3, atol=2e-4)

    # -- case 2: multiple tiles + ragged tail (N=20 -> 3 tiles of 8 rows) --
    N2 = 20
    x2 = 0.1 * jax.random.normal(kx2, (N2, D), dtype=jnp.float32)
    out2 = jax.block_until_ready(
        poincare_batch_norm(x2, mean_param, var_param, c=c,
                            target_block_bytes=1024))  # force tile_n = 8
    ref2 = _reference(x2, mean_param, var_param, c=c)
    assert out2.shape == (N2, D)
    assert bool(jnp.all(jnp.isfinite(out2)))
    np.testing.assert_allclose(np.asarray(out2), np.asarray(ref2),
                               rtol=1e-3, atol=2e-4)

    print("KERNEL_OK")
</pallas_src>

<mosaic_0001>
module attributes {stable_mosaic.version = 11 : i64} {
  func.func @_midpoint_sums_kernel(%arg0: i32, %arg1: memref<8x32xf32, #tpu.memory_space<vmem>>, %arg2: memref<1x1x32xf32, #tpu.memory_space<vmem>>, %arg3: memref<1x1x1xf32, #tpu.memory_space<vmem>>) attributes {dimension_semantics = [#tpu.dimension_semantics<parallel>], iteration_bounds = array<i64: 1>, scalar_prefetch = 0 : i64, scratch_operands = 0 : i64, tpu.core_type = #tpu.core_type<tc>, window_params = [{transform_indices = @transform_0, window_bounds = array<i64: 8, 32>}, {transform_indices = @transform_1, window_bounds = array<i64: 1, 1, 32>}, {transform_indices = @transform_2, window_bounds = array<i64: 1, 1, 1>}]} {
    %c0 = arith.constant 0 : index
    %c0_0 = arith.constant 0 : index
    %0 = vector.load %arg1[%c0, %c0_0] : memref<8x32xf32, #tpu.memory_space<vmem>>, vector<8x32xf32>
    %cst = arith.constant 1.000000e+00 : f32
    %1 = vector.broadcast %cst : f32 to vector<32x1xf32>
    %2 = arith.mulf %0, %0 : vector<8x32xf32>
    %cst_1 = arith.constant dense<0.000000e+00> : vector<8x1xf32>
    %3 = tpu.matmul %2, %1, %cst_1 {dimension_numbers = #tpu.dot_dimension_numbers<[1], [0], [0], [1], [0, 0, 1, 1], [], []>} : vector<8x32xf32>, vector<32x1xf32>, vector<8x1xf32> -> vector<8x1xf32>
    %cst_2 = arith.constant 1.000000e+00 : f32
    %4 = vector.broadcast %cst_2 : f32 to vector<8x1xf32>
    %5 = arith.mulf %4, %3 : vector<8x1xf32>
    %cst_3 = arith.constant 1.000000e+00 : f32
    %6 = vector.broadcast %cst_3 : f32 to vector<8x1xf32>
    %7 = arith.subf %6, %5 : vector<8x1xf32>
    %cst_4 = arith.constant 1.000000e-15 : f32
    %8 = vector.broadcast %cst_4 : f32 to vector<8x1xf32>
    %9 = arith.maximumf %7, %8 : vector<8x1xf32>
    %cst_5 = arith.constant 2.000000e+00 : f32
    %10 = vector.broadcast %cst_5 : f32 to vector<8x1xf32>
    %11 = arith.divf %10, %9 : vector<8x1xf32>
    %12 = vector.broadcast %11 : vector<8x1xf32> to vector<8x32xf32>
    %13 = arith.mulf %12, %0 : vector<8x32xf32>
    %cst_6 = arith.constant 1.000000e+00 : f32
    %14 = vector.broadcast %cst_6 : f32 to vector<8x1xf32>
    %15 = arith.subf %11, %14 : vector<8x1xf32>
    %cst_7 = arith.constant dense<0.000000e+00> : vector<32xf32>
    %16 = vector.multi_reduction <add>, %13, %cst_7 [0] : vector<8x32xf32> to vector<32xf32>
    %17 = vector.shape_cast %16 : vector<32xf32> to vector<1x32xf32>
    %18 = vector.shape_cast %17 : vector<1x32xf32> to vector<1x1x32xf32>
    %c0_8 = arith.constant 0 : index
    %c0_9 = arith.constant 0 : index
    %c0_10 = arith.constant 0 : index
    %19 = vector.load %arg2[%c0_8, %c0_9, %c0_10] : memref<1x1x32xf32, #tpu.memory_space<vmem>>, vector<1x1x32xf32>
    tpu.vector_store %arg2[%c0_8, %c0_9, %c0_10], %18 {strides = array<i32>} : memref<1x1x32xf32, #tpu.memory_space<vmem>>, vector<1x1x32xf32>,
    %cst_11 = arith.constant dense<0.000000e+00> : vector<1xf32>
    %20 = vector.multi_reduction <add>, %15, %cst_11 [0] : vector<8x1xf32> to vector<1xf32>
    %21 = vector.shape_cast %20 : vector<1xf32> to vector<1x1xf32>
    %22 = vector.shape_cast %21 : vector<1x1xf32> to vector<1x1x1xf32>
    %c0_12 = arith.constant 0 : index
    %c0_13 = arith.constant 0 : index
    %c0_14 = arith.constant 0 : index
    %23 = vector.load %arg3[%c0_12, %c0_13, %c0_14] : memref<1x1x1xf32, #tpu.memory_space<vmem>>, vector<1x1x1xf32>
    tpu.vector_store %arg3[%c0_12, %c0_13, %c0_14], %22 {strides = array<i32>} : memref<1x1x1xf32, #tpu.memory_space<vmem>>, vector<1x1x1xf32>,
    return
  }
  func.func @transform_0(%arg0: i32) -> (i32, i32) {
    %c0_i32 = arith.constant 0 : i32
    %c0_i32_0 = arith.constant 0 : i32
    return %arg0, %c0_i32 : i32, i32
  }
  func.func @transform_1(%arg0: i32) -> (i32, i32, i32) {
    %c0_i32 = arith.constant 0 : i32
    %c0_i32_0 = arith.constant 0 : i32
    %c0_i32_1 = arith.constant 0 : i32
    return %arg0, %c0_i32, %c0_i32_0 : i32, i32, i32
  }
  func.func @transform_2(%arg0: i32) -> (i32, i32, i32) {
    %c0_i32 = arith.constant 0 : i32
    %c0_i32_0 = arith.constant 0 : i32
    %c0_i32_1 = arith.constant 0 : i32
    return %arg0, %c0_i32, %c0_i32_0 : i32, i32, i32
  }
}

</mosaic_0001>

<llo_original>
// kernel: tpu_custom_call.1
$region0: #{tpu_custom_call.1}
  #allocation0 [shape = 'u32[]', space=smem, size = 0x4, offset = 0x4, fixed_abs, tag = 'smem constant byte address 0x4 - core index']
  #allocation1 [shape = 'u32[144,128]{1,0:T(1,128)}', space=vmem, size = 0x12000, scoped, tag = 'internal scratch']
  %s0 = inlined_call_operand.hbm [shape: f32[8,32], index: 0, kind: input, shape index: {}]
  %s1 = inlined_call_operand.hbm [shape: f32[1,1,32], index: 1, kind: output, shape index: {0}]
  %s2 = inlined_call_operand.hbm [shape: f32[1,1,1], index: 2, kind: output, shape index: {1}]
  %3 = xla_tuple %s1, %s2
  %s4 = sld [smem:[#allocation0]]
  $region26: #{tpu_custom_call.1} parent=0
    _
  %s6 = ssub.s32 1, %s4
  %s7 = scalar_select 0, %s6, %s4
  $region1: #{tpu_custom_call.1} parent=0
    #allocation2 [shape = 'u8[4096]{0}', space=vmem, size = 0x1000, scoped, tag = 'input window, operand 0, single buffered']
    #allocation3 [shape = 's32[1]{0}', space=sflag, size = 0x4, scoped, tag = 'scoped memory for tpu_custom_call.1']
    #allocation4 [shape = 's32[1]{0}', space=sflag, size = 0x4, scoped, tag = 'scoped memory for tpu_custom_call.1']
    #allocation5 [shape = 'u8[512]{0}', space=vmem, size = 0x400, scoped, tag = 'output window, operand 0, single buffered']
    #allocation6 [shape = 'u8[512]{0}', space=vmem, size = 0x400, scoped, tag = 'output window, operand 1, single buffered']
    #allocation7 [shape = 's32[1]{0}', space=sflag, size = 0x4, scoped, tag = 'scoped memory for tpu_custom_call.1']
    %8 = vsyncpa [#allocation3], 0
    %9 = vsyncpa [#allocation4], 0
    %10 = vsyncpa [#allocation7], 0
    // Predicated region
    $region2: #{tpu_custom_call.1} parent=1 // pred_check
      _
    $region3: #{tpu_custom_call.1} parent=1 // pred_check_branch
      %12 = sbr.rel (0) target = $region5
    $region4: #{tpu_custom_call.1} parent=1 // pred_region
      %s14 = ssub.s32 128, 128
      %15 = vsyncadd [#allocation3], %s14
      %s17 = sshll.u32 [#allocation2], 4
      %s18 = int_to_ptr.vmem [resolvable:$true] %s17
      %20 = dma.hbm_to_vmem [thread:$0]  %s0, 128, %s18, [#allocation3]
    $region5: #{tpu_custom_call.1} parent=1 // pred_fallthru
      _
    // Predicated region
    $region6: #{tpu_custom_call.1} parent=1 // pred_check
      _
    $region7: #{tpu_custom_call.1} parent=1 // pred_check_branch
      %22 = sbr.rel (0) target = $region9
    $region8: #{tpu_custom_call.1} parent=1 // pred_region
      %23 = dma.done [#allocation3], 128
    $region9: #{tpu_custom_call.1} parent=1 // pred_fallthru
      _
    %v24 = vld [vmem:[#allocation2] sm:$0xff]
    %v25 = vmul.f32 %v24, %v24
    %vm26 = vcmask 261120
    %v28 = vsel %vm26, %v25, 0
    %30 = vmatprep.subr.mxu0 0.0
    %31 = vmatpush1.msra.mxu0 0.0
    %32 = vmatprep.subr.mxu0 0.0
    %33 = vmatpush1.msra.mxu0 0.0
    %34 = vmatprep.subr.mxu0 0.0
    %35 = vmatpush1.msra.mxu0 0.0
    %36 = vmatprep.subr.mxu0 0.0
    %37 = vmatpush1.msra.mxu0 0.0
    %38 = vmatprep.subr.mxu0 0.0
    %39 = vmatpush1.msra.mxu0 0.0
    %40 = vmatprep.subr.mxu0 0.0
    %41 = vmatpush1.msra.mxu0 0.0
    %42 = vmatprep.subr.mxu0 0.0
    %43 = vmatpush1.msra.mxu0 0.0
    %44 = vmatprep.subr.mxu0 0.0
    %45 = vmatpush1.msra.mxu0 0.0
    %46 = vmatprep.subr.mxu0 0.0
    %47 = vmatpush1.msra.mxu0 0.0
    %48 = vmatprep.subr.mxu0 0.0
    %49 = vmatpush1.msra.mxu0 0.0
    %50 = vmatprep.subr.mxu0 0.0
    %51 = vmatpush1.msra.mxu0 0.0
    %52 = vmatprep.subr.mxu0 0.0
    %53 = vmatpush1.msra.mxu0 0.0
    %54 = vmatprep.subr.mxu0 0.0
    %55 = vmatpush1.msra.mxu0 1.0
    %56 = vmatprep.subr.mxu0 0.0
    %57 = vmatpush1.msra.mxu0 1.0
    %58 = vmatprep.subr.mxu0 0.0
    %59 = vmatpush1.msra.mxu0 1.0
    %60 = vmatprep.subr.mxu0 0.0
    %61 = vmatpush1.msra.mxu0 1.0
    %62 = vmatprep.subr.mxu0 0.0
    %63 = vmatpush2.msra.mxu0 0.0
    %64 = vmatprep.subr.mxu0 0.0
    %65 = vmatpush2.msra.mxu0 0.0
    %66 = vmatprep.subr.mxu0 0.0
    %67 = vmatpush2.msra.mxu0 0.0
    %68 = vmatprep.subr.mxu0 0.0
    %69 = vmatpush2.msra.mxu0 0.0
    %70 = vmatprep.subr.mxu0 0.0
    %71 = vmatpush2.msra.mxu0 0.0
    %72 = vmatprep.subr.mxu0 0.0
    %73 = vmatpush2.msra.mxu0 0.0
    %74 = vmatprep.subr.mxu0 0.0
    %75 = vmatpush2.msra.mxu0 0.0
    %76 = vmatprep.subr.mxu0 0.0
    %77 = vmatpush2.msra.mxu0 0.0
    %78 = vmatprep.subr.mxu0 0.0
    %79 = vmatpush2.msra.mxu0 0.0
    %80 = vmatprep.subr.mxu0 0.0
    %81 = vmatpush2.msra.mxu0 0.0
    %82 = vmatprep.subr.mxu0 0.0
    %83 = vmatpush2.msra.mxu0 0.0
    %84 = vmatprep.subr.mxu0 0.0
    %85 = vmatpush2.msra.mxu0 0.0
    %86 = vmatprep.subr.mxu0 0.0
    %87 = vmatpush2.msra.mxu0 0.0
    %88 = vmatprep.subr.mxu0 0.0
    %89 = vmatpush2.msra.mxu0 0.0
    %90 = vmatprep.subr.mxu0 0.0
    %91 = vmatpush2.msra.mxu0 0.0
    %92 = vmatprep.subr.mxu0 0.0
    %93 = vmatpush2.msra.mxu0 0.0
    %94 = vmatprep.mubr.f32.mxu0 0.0
    %95 = vmatmul.mubr.f32.gmra.mxu0 %v28
    %v96 = vpop.f32.mrf.mxu0
    %v97 = vadd.f32 0.0, %v96
    %v98 = vpop.f32.mrf.mxu0
    %99 = vdwg.mxu0
    %v100 = vsub.f32 1.0, %v97
    %v101 = vmax.f32 %v100, 1e-15
    %v102 = vrcp.pop %v101
    %v103 = vmul.f32 2.0, %v102
    %105 = vset.pattern.permute.xlu0 0
    %106 = vperm.xlu0 %105, %v103
    %v107 = vpop.permute.xlu0 %106
    %v109 = vmul.f32 %v107, %v24
    %v110 = vsub.f32 %v103, 1.0
    %v111 = vsel %vm26, %v109, 0.0
    %v112 = vrot.slane %v111, 4
    %v113 = vadd.f32 %v111, %v112
    %v114 = vrot.slane %v113, 2
    %v115 = vadd.f32 %v113, %v114
    %v116 = vrot.slane %v115, 1
    %v117 = vadd.f32 %v115, %v116
    %vm118 = vcmask 253952
    %119 = vst.msk [vmem:[#allocation5] sm:$0x1] %vm118, %v117
    %vm120 = vcmask 7168
    %v121 = vsel %vm120, %v110, 0.0
    %v122 = vrot.slane %v121, 4
    %v123 = vadd.f32 %v121, %v122
    %v124 = vrot.slane %v123, 2
    %v125 = vadd.f32 %v123, %v124
    %v126 = vrot.slane %v125, 1
    %v127 = vadd.f32 %v125, %v126
    %vm128 = vcmask 0
    %129 = vst.msk [vmem:[#allocation6] sm:$0x1] %vm128, %v127
    // Predicated region
    $region10: #{tpu_custom_call.1} parent=1 // pred_check
      _
    $region11: #{tpu_custom_call.1} parent=1 // pred_check_branch
      %131 = sbr.rel (0) target = $region13
    $region12: #{tpu_custom_call.1} parent=1 // pred_region
      %s133 = ssub.s32 16, 16
      %134 = vsyncadd [#allocation4], %s133
      %s136 = sshll.u32 [#allocation5], 4
      %s137 = int_to_ptr.vmem [resolvable:$true] %s136
      %139 = dma.vmem_to_hbm [thread:$0]  %s137, 16, %s1, [#allocation4]
    $region13: #{tpu_custom_call.1} parent=1 // pred_fallthru
      _
    // Predicated region
    $region14: #{tpu_custom_call.1} parent=1 // pred_check
      _
    $region15: #{tpu_custom_call.1} parent=1 // pred_check_branch
      %141 = sbr.rel (0) target = $region17
    $region16: #{tpu_custom_call.1} parent=1 // pred_region
      %s143 = ssub.s32 16, 16
      %144 = vsyncadd [#allocation7], %s143
      %s146 = sshll.u32 [#allocation6], 4
      %s147 = int_to_ptr.vmem [resolvable:$true] %s146
      %149 = dma.vmem_to_hbm [thread:$0]  %s147, 16, %s2, [#allocation7]
    $region17: #{tpu_custom_call.1} parent=1 // pred_fallthru
      _
    // Predicated region
    $region18: #{tpu_custom_call.1} parent=1 // pred_check
      _
    $region19: #{tpu_custom_call.1} parent=1 // pred_check_branch
      %151 = sbr.rel (0) target = $region21
    $region20: #{tpu_custom_call.1} parent=1 // pred_region
      %152 = dma.done [#allocation4], 16
    $region21: #{tpu_custom_call.1} parent=1 // pred_fallthru
      _
    // Predicated region
    $region22: #{tpu_custom_call.1} parent=1 // pred_check
      _
    $region23: #{tpu_custom_call.1} parent=1 // pred_check_branch
      %154 = sbr.rel (0) target = $region25
    $region24: #{tpu_custom_call.1} parent=1 // pred_region
      %155 = dma.done [#allocation7], 16
    $region25: #{tpu_custom_call.1} parent=1 // pred_fallthru
      _
    %156 = vsyncpa [#allocation3], 1
    %157 = vsyncpa [#allocation4], 1
    %158 = vsyncpa [#allocation7], 1

</llo_original>
